<compile_context>
chip_gen: v5e
topology: v5e:2x2
jax: 0.10.0
libtpu: 0.0.40
codegen_flags: <defaults>
</compile_context>

<pallas_src>
from functools import partial

import jax
import jax.numpy as jnp
from jax.experimental import pallas as pl
from jax.experimental.pallas import tpu as pltpu


# ----------------------------------------------------------------------------
# Kernel
# ----------------------------------------------------------------------------
def _fusion_kernel(M, F, H, dims, *refs):
    feat_refs = refs[:M]
    wblk_ref, w1bd_ref, pvec_ref = refs[M], refs[M + 1], refs[M + 2]
    fused_ref, weights_ref = refs[M + 3], refs[M + 4]
    MF, MH = M * F, M * H
    TB = feat_refs[0].shape[0]

    # 1) Per-modality Linear layers.  Each feature multiplies the row-block of
    #    the block-diagonal weight it owns; off-block columns are zero, so the
    #    accumulated sum IS the concatenated "stack" [TB, M*F].  No activation
    #    concat, no zero-padding of features, one small MXU push per modality.
    r = dims[0]
    stack = jnp.dot(feat_refs[0][...].astype(jnp.float32), wblk_ref[0:r, :],
                    preferred_element_type=jnp.float32)
    for m in range(1, M):
        d = dims[m]
        stack = stack + jnp.dot(feat_refs[m][...].astype(jnp.float32),
                                wblk_ref[r:r + d, :],
                                preferred_element_type=jnp.float32)
        r += d
    stack = stack + pvec_ref[0:1, 0:MF]                    # concat'd per-modality biases

    # 2) attention_fc1 for all modalities: ONE matmul with block-diagonal W1.
    h = jnp.dot(stack, w1bd_ref[...], preferred_element_type=jnp.float32)   # [TB, M*H]
    h = jnp.maximum(h + pvec_ref[1:2, 0:MH], 0.0)          # + b1 (tiled), ReLU

    # 3) attention_fc2: VPU multiply by tiled w2, XLU lane-reduce per modality
    #    group (no wasteful N=1 MXU pass).  b2 dropped: softmax-invariant.
    t = h * pvec_ref[2:3, 0:MH]                            # [TB, M*H]
    scores = [jnp.sum(t[:, m * H:(m + 1) * H], axis=-1, keepdims=True)
              for m in range(M)]                           # M x [TB, 1]

    # 4) Softmax over the modality axis (static unroll, M is tiny).
    mmax = scores[0]
    for m in range(1, M):
        mmax = jnp.maximum(mmax, scores[m])
    exps = [jnp.exp(s - mmax) for s in scores]
    denom = exps[0]
    for m in range(1, M):
        denom = denom + exps[m]
    inv = pl.reciprocal(denom, approx=False)               # exact: keeps 1e-5 weight tol
    wts = [e * inv for e in exps]                          # M x [TB, 1]

    # 5) Weighted sum of the transformed modalities (VPU).
    fused = wts[0] * stack[:, 0:F]
    for m in range(1, M):
        fused = fused + wts[m] * stack[:, m * F:(m + 1) * F]   # [TB, F]
    fused_ref[...] = fused.astype(fused_ref.dtype)

    # 6) Attention weights [TB, M] assembled with iota/select -> ONE store
    #    (replaces the previous M one-lane masked stores).
    col = jax.lax.broadcasted_iota(jnp.int32, (TB, M), 1)
    w_all = jnp.zeros((TB, M), jnp.float32)
    for m in range(M):
        w_all = jnp.where(col == m, wts[m], w_all)
    weights_ref[...] = w_all.astype(weights_ref.dtype)


# ----------------------------------------------------------------------------
# One-time parameter packing (hoisted out of the per-call path)
# ----------------------------------------------------------------------------
def pack_modality_fusion_params(transformer_params, attn1_params, attn2_params):
    M = len(transformer_params)
    dims = tuple(int(W.shape[0]) for W, _ in transformer_params)
    F = int(transformer_params[0][0].shape[1])
    W1, b1 = attn1_params
    w2, _b2 = attn2_params            # b2 is softmax-invariant -> dropped entirely
    H = int(W1.shape[1])
    D_sum = sum(dims)
    MF, MH = M * F, M * H
    PW = max(MF, MH)

    # Block-diagonal per-modality Linear weights: [D_sum, M*F].
    W_blk = jnp.zeros((D_sum, MF), jnp.float32)
    r = 0
    for m, (Wm, _) in enumerate(transformer_params):
        W_blk = W_blk.at[r:r + dims[m], m * F:(m + 1) * F].set(Wm.astype(jnp.float32))
        r += dims[m]

    # Block-diagonal attention_fc1 weight (M copies of W1): [M*F, M*H].
    W1f = W1.astype(jnp.float32)
    W1_bd = jnp.zeros((MF, MH), jnp.float32)
    for m in range(M):
        W1_bd = W1_bd.at[m * F:(m + 1) * F, m * H:(m + 1) * H].set(W1f)

    # Packed small vectors (single buffer -> single DMA):
    #   row0[:MF] = concat(b_m),  row1[:MH] = tile(b1, M),  row2[:MH] = tile(w2, M).
    pvec = jnp.zeros((3, PW), jnp.float32)
    pvec = pvec.at[0, :MF].set(
        jnp.concatenate([bm.astype(jnp.float32) for _, bm in transformer_params]))
    pvec = pvec.at[1, :MH].set(jnp.tile(b1.astype(jnp.float32), M))
    pvec = pvec.at[2, :MH].set(jnp.tile(w2.astype(jnp.float32)[0], M))

    return dict(W_blk=W_blk, W1_bd=W1_bd, pvec=pvec, M=M, F=F, H=H, dims=dims)


# ----------------------------------------------------------------------------
# Forward wrapper (per call: ONE pallas_call, nothing else)
# ----------------------------------------------------------------------------
def modality_fusion_with_attention(features, packed):
    M, F, H, dims = packed["M"], packed["F"], packed["H"], packed["dims"]
    MF, MH = M * F, M * H
    D_sum = packed["W_blk"].shape[0]
    PW = packed["pvec"].shape[1]
    B = features[0].shape[0]

    # Batch tile: whole batch when small; large (>=512-class) tiles over a
    # parallel grid axis when B is large (the parallel axis only shards across
    # multiple TensorCores once there is more than one tile).
    TB = B if B <= 1024 else 1024
    grid = (pl.cdiv(B, TB),)
    # NOTE: if B % TB != 0 the padded rows of the last tile compute garbage
    # through exp/reciprocal, but softmax is row-local and the writeback is
    # masked, so valid rows are unaffected.

    feat_specs = [pl.BlockSpec((TB, d), lambda i: (i, 0)) for d in dims]
    in_specs = feat_specs + [
        pl.BlockSpec((D_sum, MF), lambda i: (0, 0)),   # W_blk (resident)
        pl.BlockSpec((MF, MH), lambda i: (0, 0)),      # W1_bd (resident)
        pl.BlockSpec((3, PW), lambda i: (0, 0)),       # packed small vectors
    ]

    kernel = partial(_fusion_kernel, M, F, H, dims)
    fused, weights = pl.pallas_call(
        kernel,
        out_shape=(
            jax.ShapeDtypeStruct((B, F), jnp.float32),
            jax.ShapeDtypeStruct((B, M), jnp.float32),
        ),
        grid=grid,
        in_specs=in_specs,
        out_specs=(
            pl.BlockSpec((TB, F), lambda i: (i, 0)),
            pl.BlockSpec((TB, M), lambda i: (i, 0)),
        ),
        compiler_params=pltpu.CompilerParams(
            dimension_semantics=("parallel",)),
    )(*features, packed["W_blk"], packed["W1_bd"], packed["pvec"])

    return fused, weights                               # weights already [B, M]


# ----------------------------------------------------------------------------
# Pure-JAX reference mirroring the PyTorch forward
# ----------------------------------------------------------------------------
def _reference(features, transformer_params, attn1_params, attn2_params):
    W1, b1 = attn1_params
    w2, b2 = attn2_params
    transformed = [f @ Wm + bm for f, (Wm, bm) in zip(features, transformer_params)]
    stack = jnp.stack(transformed, axis=1)                   # [B, M, F]
    h = jnp.maximum(stack @ W1 + b1, 0.0)                    # [B, M, H]
    scores = h @ w2[0] + b2[0]                               # [B, M]
    weights = jax.nn.softmax(scores, axis=1)
    fused = jnp.sum(stack * weights[..., None], axis=1)      # [B, F]
    return fused, weights


if __name__ == "__main__":
    key = jax.random.PRNGKey(0)

    B = 8
    modality_dims = [16, 24, 32]
    F_dim = 32
    H = 64
    M = len(modality_dims)

    # Deterministic parameter init (synthetic, not a checkpoint load).
    keys = jax.random.split(key, 3 + 2 * M + 4)
    transformer_params = []
    for i, d in enumerate(modality_dims):
        Wm = jax.random.normal(keys[2 * i], (d, F_dim), jnp.float32) * 0.1
        bm = jax.random.normal(keys[2 * i + 1], (F_dim,), jnp.float32) * 0.1
        transformer_params.append((Wm, bm))
    k0 = 2 * M
    W1 = jax.random.normal(keys[k0 + 0], (F_dim, H), jnp.float32) * 0.1
    b1 = jax.random.normal(keys[k0 + 1], (H,), jnp.float32) * 0.1
    w2 = jax.random.normal(keys[k0 + 2], (1, H), jnp.float32) * 0.1   # Linear(H, 1) weight
    b2 = jax.random.normal(keys[k0 + 3], (1,), jnp.float32) * 0.1

    # Deterministic example inputs: one feature tensor per modality.
    fkeys = jax.random.split(keys[k0 + 3], M + 1)[1:]
    features = [jax.random.normal(fkeys[i], (B, d), jnp.float32)
                for i, d in enumerate(modality_dims)]

    # Pack parameters ONCE (init-time), then run the fused forward.
    packed = pack_modality_fusion_params(transformer_params, (W1, b1), (w2, b2))
    packed = jax.tree_util.tree_map(
        lambda x: jax.block_until_ready(x) if isinstance(x, jax.Array) else x, packed)

    fused, weights = modality_fusion_with_attention(features, packed)
    fused = jax.block_until_ready(fused)
    weights = jax.block_until_ready(weights)

    fused_ref, weights_ref = _reference(features, transformer_params, (W1, b1), (w2, b2))
    assert fused.shape == (B, F_dim) and weights.shape == (B, M)
    assert jnp.allclose(fused, fused_ref, atol=1e-4, rtol=1e-4)
    assert jnp.allclose(weights, weights_ref, atol=1e-5, rtol=1e-5)

    print("KERNEL_OK")
</pallas_src>

<mosaic_0001>
module attributes {stable_mosaic.version = 11 : i64} {
  func.func @_fusion_kernel(%arg0: i32, %arg1: memref<8x16xf32, #tpu.memory_space<vmem>>, %arg2: memref<8x24xf32, #tpu.memory_space<vmem>>, %arg3: memref<8x32xf32, #tpu.memory_space<vmem>>, %arg4: memref<72x96xf32, #tpu.memory_space<vmem>>, %arg5: memref<96x192xf32, #tpu.memory_space<vmem>>, %arg6: memref<3x192xf32, #tpu.memory_space<vmem>>, %arg7: memref<8x32xf32, #tpu.memory_space<vmem>>, %arg8: memref<8x3xf32, #tpu.memory_space<vmem>>) attributes {dimension_semantics = [#tpu.dimension_semantics<parallel>], iteration_bounds = array<i64: 1>, scalar_prefetch = 0 : i64, scratch_operands = 0 : i64, tpu.core_type = #tpu.core_type<tc>, window_params = [{transform_indices = @transform_0, window_bounds = array<i64: 8, 16>}, {transform_indices = @transform_1, window_bounds = array<i64: 8, 24>}, {transform_indices = @transform_2, window_bounds = array<i64: 8, 32>}, {pipeline_mode = #tpu.pipeline_mode<synchronous>, transform_indices = @transform_3, window_bounds = array<i64: 72, 96>}, {pipeline_mode = #tpu.pipeline_mode<synchronous>, transform_indices = @transform_4, window_bounds = array<i64: 96, 192>}, {pipeline_mode = #tpu.pipeline_mode<synchronous>, transform_indices = @transform_5, window_bounds = array<i64: 3, 192>}, {transform_indices = @transform_6, window_bounds = array<i64: 8, 32>}, {transform_indices = @transform_7, window_bounds = array<i64: 8, 3>}]} {
    %c0 = arith.constant 0 : index
    %c0_0 = arith.constant 0 : index
    %0 = vector.load %arg1[%c0, %c0_0] : memref<8x16xf32, #tpu.memory_space<vmem>>, vector<8x16xf32>
    %c0_1 = arith.constant 0 : index
    %c0_2 = arith.constant 0 : index
    %1 = vector.load %arg4[%c0_1, %c0_2] : memref<72x96xf32, #tpu.memory_space<vmem>>, vector<16x96xf32>
    %cst = arith.constant dense<0.000000e+00> : vector<8x96xf32>
    %2 = tpu.matmul %0, %1, %cst {dimension_numbers = #tpu.dot_dimension_numbers<[1], [0], [0], [1], [0, 0, 1, 1], [], []>} : vector<8x16xf32>, vector<16x96xf32>, vector<8x96xf32> -> vector<8x96xf32>
    %c0_3 = arith.constant 0 : index
    %c0_4 = arith.constant 0 : index
    %3 = vector.load %arg2[%c0_3, %c0_4] : memref<8x24xf32, #tpu.memory_space<vmem>>, vector<8x24xf32>
    %c16 = arith.constant 16 : index
    %c0_5 = arith.constant 0 : index
    %4 = vector.load %arg4[%c16, %c0_5] : memref<72x96xf32, #tpu.memory_space<vmem>>, vector<24x96xf32>
    %cst_6 = arith.constant dense<0.000000e+00> : vector<8x96xf32>
    %5 = tpu.matmul %3, %4, %cst_6 {dimension_numbers = #tpu.dot_dimension_numbers<[1], [0], [0], [1], [0, 0, 1, 1], [], []>} : vector<8x24xf32>, vector<24x96xf32>, vector<8x96xf32> -> vector<8x96xf32>
    %6 = arith.addf %2, %5 : vector<8x96xf32>
    %c0_7 = arith.constant 0 : index
    %c0_8 = arith.constant 0 : index
    %7 = vector.load %arg3[%c0_7, %c0_8] : memref<8x32xf32, #tpu.memory_space<vmem>>, vector<8x32xf32>
    %c40 = arith.constant 40 : index
    %c0_9 = arith.constant 0 : index
    %8 = vector.load %arg4[%c40, %c0_9] : memref<72x96xf32, #tpu.memory_space<vmem>>, vector<32x96xf32>
    %cst_10 = arith.constant dense<0.000000e+00> : vector<8x96xf32>
    %9 = tpu.matmul %7, %8, %cst_10 {dimension_numbers = #tpu.dot_dimension_numbers<[1], [0], [0], [1], [0, 0, 1, 1], [], []>} : vector<8x32xf32>, vector<32x96xf32>, vector<8x96xf32> -> vector<8x96xf32>
    %10 = arith.addf %6, %9 : vector<8x96xf32>
    %c0_11 = arith.constant 0 : index
    %c0_12 = arith.constant 0 : index
    %11 = vector.load %arg6[%c0_11, %c0_12] : memref<3x192xf32, #tpu.memory_space<vmem>>, vector<1x96xf32>
    %12 = vector.broadcast %11 : vector<1x96xf32> to vector<8x96xf32>
    %13 = arith.addf %10, %12 : vector<8x96xf32>
    %c0_13 = arith.constant 0 : index
    %c0_14 = arith.constant 0 : index
    %14 = vector.load %arg5[%c0_13, %c0_14] : memref<96x192xf32, #tpu.memory_space<vmem>>, vector<96x192xf32>
    %cst_15 = arith.constant dense<0.000000e+00> : vector<8x192xf32>
    %15 = tpu.matmul %13, %14, %cst_15 {dimension_numbers = #tpu.dot_dimension_numbers<[1], [0], [0], [1], [0, 0, 1, 1], [], []>} : vector<8x96xf32>, vector<96x192xf32>, vector<8x192xf32> -> vector<8x192xf32>
    %c1 = arith.constant 1 : index
    %c0_16 = arith.constant 0 : index
    %16 = vector.load %arg6[%c1, %c0_16] : memref<3x192xf32, #tpu.memory_space<vmem>>, vector<1x192xf32>
    %17 = vector.broadcast %16 : vector<1x192xf32> to vector<8x192xf32>
    %18 = arith.addf %15, %17 : vector<8x192xf32>
    %cst_17 = arith.constant 0.000000e+00 : f32
    %19 = vector.broadcast %cst_17 : f32 to vector<8x192xf32>
    %20 = arith.maximumf %18, %19 : vector<8x192xf32>
    %c2 = arith.constant 2 : index
    %c0_18 = arith.constant 0 : index
    %21 = vector.load %arg6[%c2, %c0_18] : memref<3x192xf32, #tpu.memory_space<vmem>>, vector<1x192xf32>
    %22 = vector.broadcast %21 : vector<1x192xf32> to vector<8x192xf32>
    %23 = arith.mulf %20, %22 : vector<8x192xf32>
    %24 = vector.extract_strided_slice %23 {offsets = [0, 0], sizes = [8, 64], strides = [1, 1]} : vector<8x192xf32> to vector<8x64xf32>
    %cst_19 = arith.constant dense<0.000000e+00> : vector<8xf32>
    %25 = vector.multi_reduction <add>, %24, %cst_19 [1] : vector<8x64xf32> to vector<8xf32>
    %26 = vector.shape_cast %25 : vector<8xf32> to vector<8x1xf32>
    %27 = vector.extract_strided_slice %23 {offsets = [0, 64], sizes = [8, 64], strides = [1, 1]} : vector<8x192xf32> to vector<8x64xf32>
    %cst_20 = arith.constant dense<0.000000e+00> : vector<8xf32>
    %28 = vector.multi_reduction <add>, %27, %cst_20 [1] : vector<8x64xf32> to vector<8xf32>
    %29 = vector.shape_cast %28 : vector<8xf32> to vector<8x1xf32>
    %30 = vector.extract_strided_slice %23 {offsets = [0, 128], sizes = [8, 64], strides = [1, 1]} : vector<8x192xf32> to vector<8x64xf32>
    %cst_21 = arith.constant dense<0.000000e+00> : vector<8xf32>
    %31 = vector.multi_reduction <add>, %30, %cst_21 [1] : vector<8x64xf32> to vector<8xf32>
    %32 = vector.shape_cast %31 : vector<8xf32> to vector<8x1xf32>
    %33 = arith.maximumf %26, %29 : vector<8x1xf32>
    %34 = arith.maximumf %33, %32 : vector<8x1xf32>
    %35 = arith.subf %26, %34 : vector<8x1xf32>
    %36 = math.exp %35 : vector<8x1xf32>
    %37 = arith.subf %29, %34 : vector<8x1xf32>
    %38 = math.exp %37 : vector<8x1xf32>
    %39 = arith.subf %32, %34 : vector<8x1xf32>
    %40 = math.exp %39 : vector<8x1xf32>
    %41 = arith.addf %36, %38 : vector<8x1xf32>
    %42 = arith.addf %41, %40 : vector<8x1xf32>
    %43 = tpu.reciprocal %42 : vector<8x1xf32> -> vector<8x1xf32>
    %44 = arith.mulf %36, %43 : vector<8x1xf32>
    %45 = arith.mulf %38, %43 : vector<8x1xf32>
    %46 = arith.mulf %40, %43 : vector<8x1xf32>
    %47 = vector.extract_strided_slice %13 {offsets = [0, 0], sizes = [8, 32], strides = [1, 1]} : vector<8x96xf32> to vector<8x32xf32>
    %48 = vector.broadcast %44 : vector<8x1xf32> to vector<8x32xf32>
    %49 = arith.mulf %48, %47 : vector<8x32xf32>
    %50 = vector.extract_strided_slice %13 {offsets = [0, 32], sizes = [8, 32], strides = [1, 1]} : vector<8x96xf32> to vector<8x32xf32>
    %51 = vector.broadcast %45 : vector<8x1xf32> to vector<8x32xf32>
    %52 = arith.mulf %51, %50 : vector<8x32xf32>
    %53 = arith.addf %49, %52 : vector<8x32xf32>
    %54 = vector.extract_strided_slice %13 {offsets = [0, 64], sizes = [8, 32], strides = [1, 1]} : vector<8x96xf32> to vector<8x32xf32>
    %55 = vector.broadcast %46 : vector<8x1xf32> to vector<8x32xf32>
    %56 = arith.mulf %55, %54 : vector<8x32xf32>
    %57 = arith.addf %53, %56 : vector<8x32xf32>
    %c0_22 = arith.constant 0 : index
    %c0_23 = arith.constant 0 : index
    %58 = vector.load %arg7[%c0_22, %c0_23] : memref<8x32xf32, #tpu.memory_space<vmem>>, vector<8x32xf32>
    tpu.vector_store %arg7[%c0_22, %c0_23], %57 {strides = array<i32>} : memref<8x32xf32, #tpu.memory_space<vmem>>, vector<8x32xf32>,
    %59 = tpu.iota {dimensions = array<i32: 1>} : vector<8x3xi32>
    %cst_24 = arith.constant 0.000000e+00 : f32
    %60 = vector.broadcast %cst_24 : f32 to vector<8x3xf32>
    %c0_i32 = arith.constant 0 : i32
    %61 = vector.broadcast %c0_i32 : i32 to vector<8x3xi32>
    %62 = arith.cmpi eq, %59, %61 : vector<8x3xi32>
    %63 = vector.shape_cast %44 : vector<8x1xf32> to vector<8x1xf32>
    %64 = vector.broadcast %63 : vector<8x1xf32> to vector<8x3xf32>
    %65 = arith.select %62, %64, %60 : vector<8x3xi1>, vector<8x3xf32>
    %c1_i32 = arith.constant 1 : i32
    %66 = vector.broadcast %c1_i32 : i32 to vector<8x3xi32>
    %67 = arith.cmpi eq, %59, %66 : vector<8x3xi32>
    %68 = vector.shape_cast %45 : vector<8x1xf32> to vector<8x1xf32>
    %69 = vector.broadcast %68 : vector<8x1xf32> to vector<8x3xf32>
    %70 = arith.select %67, %69, %65 : vector<8x3xi1>, vector<8x3xf32>
    %c2_i32 = arith.constant 2 : i32
    %71 = vector.broadcast %c2_i32 : i32 to vector<8x3xi32>
    %72 = arith.cmpi eq, %59, %71 : vector<8x3xi32>
    %73 = vector.shape_cast %46 : vector<8x1xf32> to vector<8x1xf32>
    %74 = vector.broadcast %73 : vector<8x1xf32> to vector<8x3xf32>
    %75 = arith.select %72, %74, %70 : vector<8x3xi1>, vector<8x3xf32>
    %c0_25 = arith.constant 0 : index
    %c0_26 = arith.constant 0 : index
    %76 = vector.load %arg8[%c0_25, %c0_26] : memref<8x3xf32, #tpu.memory_space<vmem>>, vector<8x3xf32>
    tpu.vector_store %arg8[%c0_25, %c0_26], %75 {strides = array<i32>} : memref<8x3xf32, #tpu.memory_space<vmem>>, vector<8x3xf32>,
    return
  }
  func.func @transform_0(%arg0: i32) -> (i32, i32) {
    %c0_i32 = arith.constant 0 : i32
    %c0_i32_0 = arith.constant 0 : i32
    return %arg0, %c0_i32 : i32, i32
  }
  func.func @transform_1(%arg0: i32) -> (i32, i32) {
    %c0_i32 = arith.constant 0 : i32
    %c0_i32_0 = arith.constant 0 : i32
    return %arg0, %c0_i32 : i32, i32
  }
  func.func @transform_2(%arg0: i32) -> (i32, i32) {
    %c0_i32 = arith.constant 0 : i32
    %c0_i32_0 = arith.constant 0 : i32
    return %arg0, %c0_i32 : i32, i32
  }
  func.func @transform_3(%arg0: i32) -> (i32, i32) {
    %c0_i32 = arith.constant 0 : i32
    %c0_i32_0 = arith.constant 0 : i32
    %c0_i32_1 = arith.constant 0 : i32
    return %c0_i32, %c0_i32_0 : i32, i32
  }
  func.func @transform_4(%arg0: i32) -> (i32, i32) {
    %c0_i32 = arith.constant 0 : i32
    %c0_i32_0 = arith.constant 0 : i32
    %c0_i32_1 = arith.constant 0 : i32
    return %c0_i32, %c0_i32_0 : i32, i32
  }
  func.func @transform_5(%arg0: i32) -> (i32, i32) {
    %c0_i32 = arith.constant 0 : i32
    %c0_i32_0 = arith.constant 0 : i32
    %c0_i32_1 = arith.constant 0 : i32
    return %c0_i32, %c0_i32_0 : i32, i32
  }
  func.func @transform_6(%arg0: i32) -> (i32, i32) {
    %c0_i32 = arith.constant 0 : i32
    %c0_i32_0 = arith.constant 0 : i32
    return %arg0, %c0_i32 : i32, i32
  }
  func.func @transform_7(%arg0: i32) -> (i32, i32) {
    %c0_i32 = arith.constant 0 : i32
    %c0_i32_0 = arith.constant 0 : i32
    return %arg0, %c0_i32 : i32, i32
  }
}

</mosaic_0001>

<llo_original>
// kernel: tpu_custom_call.1
$region0: #{tpu_custom_call.1}
  #allocation0 [shape = 'u32[]', space=smem, size = 0x4, offset = 0x4, fixed_abs, tag = 'smem constant byte address 0x4 - core index']
  #allocation1 [shape = 'u32[72,128]{1,0:T(1,128)}', space=vmem, size = 0x9000, scoped, tag = 'internal scratch']
  %s0 = inlined_call_operand.hbm [shape: f32[8,16], index: 0, kind: input, shape index: {}]
  %s1 = inlined_call_operand.hbm [shape: f32[8,24], index: 1, kind: input, shape index: {}]
  %s2 = inlined_call_operand.hbm [shape: f32[8,32], index: 2, kind: input, shape index: {}]
  %s3 = inlined_call_operand.hbm [shape: f32[72,96], index: 3, kind: input, shape index: {}]
  %s4 = inlined_call_operand.hbm [shape: f32[96,192], index: 4, kind: input, shape index: {}]
  %s5 = inlined_call_operand.hbm [shape: f32[3,192], index: 5, kind: input, shape index: {}]
  %s6 = inlined_call_operand.hbm [shape: f32[8,32], index: 6, kind: output, shape index: {0}]
  %s7 = inlined_call_operand.vmem [shape: f32[8,3], index: 7, kind: output, shape index: {1}]
  %8 = xla_tuple %s6, %s7
  %s9 = sld [smem:[#allocation0]]
  $region66: #{tpu_custom_call.1} parent=0
    _
  %s11 = ssub.s32 1, %s9
  %s12 = scalar_select 0, %s11, %s9
  $region1: #{tpu_custom_call.1} parent=0
    #allocation2 [shape = 'u8[4096]{0}', space=vmem, size = 0x1000, scoped, tag = 'input window, operand 0, single buffered']
    #allocation3 [shape = 's32[1]{0}', space=sflag, size = 0x4, scoped, tag = 'scoped memory for tpu_custom_call.1']
    #allocation4 [shape = 's32[1]{0}', space=sflag, size = 0x4, scoped, tag = 'scoped memory for tpu_custom_call.1']
    #allocation5 [shape = 'u8[4096]{0}', space=vmem, size = 0x1000, scoped, tag = 'input window, operand 1, single buffered']
    #allocation6 [shape = 's32[1]{0}', space=sflag, size = 0x4, scoped, tag = 'scoped memory for tpu_custom_call.1']
    #allocation7 [shape = 'u8[4096]{0}', space=vmem, size = 0x1000, scoped, tag = 'input window, operand 2, single buffered']
    #allocation8 [shape = 'u8[36864]{0}', space=vmem, size = 0x9000, scoped, tag = 'input window, operand 3, single buffered']
    #allocation9 [shape = 's32[1]{0}', space=sflag, size = 0x4, scoped, tag = 'scoped memory for tpu_custom_call.1']
    #allocation10 [shape = 'u8[98304]{0}', space=vmem, size = 0x18000, scoped, tag = 'input window, operand 4, single buffered']
    #allocation11 [shape = 'u8[4096]{0}', space=vmem, size = 0x1000, scoped, tag = 'input window, operand 5, single buffered']
    #allocation12 [shape = 's32[1]{0}', space=sflag, size = 0x4, scoped, tag = 'scoped memory for tpu_custom_call.1']
    #allocation13 [shape = 'u8[4096]{0}', space=vmem, size = 0x1000, scoped, tag = 'output window, operand 0, single buffered']
    %13 = vsyncpa [#allocation3], 0
    %14 = vsyncpa [#allocation6], 0
    %15 = vsyncpa [#allocation9], 0
    %16 = vsyncpa [#allocation12], 0
    %17 = vsyncpa [#allocation4], 0
    // Predicated region
    $region2: #{tpu_custom_call.1} parent=1 // pred_check
      _
    $region3: #{tpu_custom_call.1} parent=1 // pred_check_branch
      %19 = sbr.rel (0) target = $region5
    $region4: #{tpu_custom_call.1} parent=1 // pred_region
      %21 = vsyncadd [#allocation3], 0
      %s23 = sshll.u32 %s0, 4
      %s24 = int_to_ptr.hbm [resolvable:$true] %s23
      %s25 = sshll.u32 [#allocation2], 4
      %s26 = int_to_ptr.vmem [resolvable:$true] %s25
      %28 = dma.hbm_to_vmem [thread:$0]  %s24, 128, %s26, [#allocation3]
    $region5: #{tpu_custom_call.1} parent=1 // pred_fallthru
      _
    // Predicated region
    $region6: #{tpu_custom_call.1} parent=1 // pred_check
      _
    $region7: #{tpu_custom_call.1} parent=1 // pred_check_branch
      %30 = sbr.rel (0) target = $region9
    $region8: #{tpu_custom_call.1} parent=1 // pred_region
      %32 = vsyncadd [#allocation6], 0
      %s34 = sshll.u32 %s1, 4
      %s35 = int_to_ptr.hbm [resolvable:$true] %s34
      %s36 = sshll.u32 [#allocation5], 4
      %s37 = int_to_ptr.vmem [resolvable:$true] %s36
      %39 = dma.hbm_to_vmem [thread:$0]  %s35, 128, %s37, [#allocation6]
    $region9: #{tpu_custom_call.1} parent=1 // pred_fallthru
      _
    // Predicated region
    $region10: #{tpu_custom_call.1} parent=1 // pred_check
      _
    $region11: #{tpu_custom_call.1} parent=1 // pred_check_branch
      %41 = sbr.rel (0) target = $region13
    $region12: #{tpu_custom_call.1} parent=1 // pred_region
      %43 = vsyncadd [#allocation6], 0
      %s45 = sshll.u32 %s2, 4
      %s46 = int_to_ptr.hbm [resolvable:$true] %s45
      %s47 = sshll.u32 [#allocation7], 4
      %s48 = int_to_ptr.vmem [resolvable:$true] %s47
      %50 = dma.hbm_to_vmem [thread:$0]  %s46, 128, %s48, [#allocation6]
    $region13: #{tpu_custom_call.1} parent=1 // pred_fallthru
      _
    // Predicated region
    $region14: #{tpu_custom_call.1} parent=1 // pred_check
      _
    $region15: #{tpu_custom_call.1} parent=1 // pred_check_branch
      %52 = sbr.rel (0) target = $region17
    $region16: #{tpu_custom_call.1} parent=1 // pred_region
      %54 = vsyncadd [#allocation9], 0
      %s55 = sshll.u32 %s3, 4
      %s56 = int_to_ptr.hbm [resolvable:$true] %s55
      %s57 = sshll.u32 [#allocation8], 4
      %s58 = int_to_ptr.vmem [resolvable:$true] %s57
      %63 = dma.hbm_to_vmem [thread:$0]  %s56, 1152, %s58, [#allocation9], 128, 128, 8
    $region17: #{tpu_custom_call.1} parent=1 // pred_fallthru
      _
    // Predicated region
    $region18: #{tpu_custom_call.1} parent=1 // pred_check
      _
    $region19: #{tpu_custom_call.1} parent=1 // pred_check_branch
      %65 = sbr.rel (0) target = $region21
    $region20: #{tpu_custom_call.1} parent=1 // pred_region
      %67 = vsyncadd [#allocation9], 0
      %s68 = sshll.u32 %s4, 4
      %s69 = int_to_ptr.hbm [resolvable:$true] %s68
      %s70 = sshll.u32 [#allocation10], 4
      %s71 = int_to_ptr.vmem [resolvable:$true] %s70
      %76 = dma.hbm_to_vmem [thread:$0]  %s69, 3072, %s71, [#allocation9], 256, 256, 16
    $region21: #{tpu_custom_call.1} parent=1 // pred_fallthru
      _
    // Predicated region
    $region22: #{tpu_custom_call.1} parent=1 // pred_check
      _
    $region23: #{tpu_custom_call.1} parent=1 // pred_check_branch
      %78 = sbr.rel (0) target = $region25
    $region24: #{tpu_custom_call.1} parent=1 // pred_region
      %80 = vsyncadd [#allocation12], 0
      %s82 = sshll.u32 %s5, 4
      %s83 = int_to_ptr.hbm [resolvable:$true] %s82
      %s84 = sshll.u32 [#allocation11], 4
      %s85 = int_to_ptr.vmem [resolvable:$true] %s84
      %87 = dma.hbm_to_vmem [thread:$0]  %s83, 128, %s85, [#allocation12]
    $region25: #{tpu_custom_call.1} parent=1 // pred_fallthru
      _
    // Predicated region
    $region26: #{tpu_custom_call.1} parent=1 // pred_check
      _
    $region27: #{tpu_custom_call.1} parent=1 // pred_check_branch
      %89 = sbr.rel (0) target = $region29
    $region28: #{tpu_custom_call.1} parent=1 // pred_region
      %91 = dma.done [#allocation3], 128
    $region29: #{tpu_custom_call.1} parent=1 // pred_fallthru
      _
    // Predicated region
    $region30: #{tpu_custom_call.1} parent=1 // pred_check
      _
    $region31: #{tpu_custom_call.1} parent=1 // pred_check_branch
      %93 = sbr.rel (0) target = $region33
    $region32: #{tpu_custom_call.1} parent=1 // pred_region
      %95 = dma.done [#allocation6], 128
    $region33: #{tpu_custom_call.1} parent=1 // pred_fallthru
      _
    // Predicated region
    $region34: #{tpu_custom_call.1} parent=1 // pred_check
      _
    $region35: #{tpu_custom_call.1} parent=1 // pred_check_branch
      %97 = sbr.rel (0) target = $region37
    $region36: #{tpu_custom_call.1} parent=1 // pred_region
      %99 = dma.done [#allocation6], 128
    $region37: #{tpu_custom_call.1} parent=1 // pred_fallthru
      _
    // Predicated region
    $region38: #{tpu_custom_call.1} parent=1 // pred_check
      _
    $region39: #{tpu_custom_call.1} parent=1 // pred_check_branch
      %101 = sbr.rel (0) target = $region41
    $region40: #{tpu_custom_call.1} parent=1 // pred_region
      %103 = dma.done [#allocation9], 1152
    $region41: #{tpu_custom_call.1} parent=1 // pred_fallthru
      _
    // Predicated region
    $region42: #{tpu_custom_call.1} parent=1 // pred_check
      _
    $region43: #{tpu_custom_call.1} parent=1 // pred_check_branch
      %105 = sbr.rel (0) target = $region45
    $region44: #{tpu_custom_call.1} parent=1 // pred_region
      %107 = dma.done [#allocation9], 3072
    $region45: #{tpu_custom_call.1} parent=1 // pred_fallthru
      _
    // Predicated region
    $region46: #{tpu_custom_call.1} parent=1 // pred_check
      _
    $region47: #{tpu_custom_call.1} parent=1 // pred_check_branch
      %109 = sbr.rel (0) target = $region49
    $region48: #{tpu_custom_call.1} parent=1 // pred_region
      %111 = dma.done [#allocation12], 128
    $region49: #{tpu_custom_call.1} parent=1 // pred_fallthru
      _
    %v112 = vld [vmem:[#allocation2] sm:$0xff]
    %v113 = vld [vmem:[#allocation8] sm:$0xff]
    %v114 = vld [vmem:[#allocation8 + $0x8] sm:$0xff]
    %v115 = vld [vmem:[#allocation5] sm:$0xff]
    %v116 = vld [vmem:[#allocation8 + $0x10] sm:$0xff]
    %v117 = vld [vmem:[#allocation8 + $0x18] sm:$0xff]
    %v118 = vld [vmem:[#allocation8 + $0x20] sm:$0xff]
    %vm119 = vcmask 195584
    %v121 = vsel %vm119, %v115, 0
    %123 = vmatpush.msra.mxu0 0.0
    %124 = vmatpush.msra.mxu0 0.0
    %125 = vmatpush.msra.mxu0 0.0
    %126 = vmatpush.msra.mxu0 0.0
    %127 = vmatpush.msra.mxu0 0.0
    %128 = vmatpush.msra.mxu0 0.0
    %129 = vmatpush.msra.mxu0 0.0
    %130 = vmatpush.msra.mxu0 0.0
    %131 = vmatpush.msra.mxu0 0.0
    %132 = vmatpush.msra.mxu0 0.0
    %133 = vmatpush.msra.mxu0 0.0
    %134 = vmatpush.msra.mxu0 0.0
    %135 = vmatpush.msra.mxu0 0.0
    %136 = vmatpush.msra.mxu0 %v118
    %137 = vmatpush.msra.mxu0 %v117
    %138 = vmatpush.msra.mxu0 %v116
    %139 = vmatmul.f32.gmra.mxu0 %v121
    %v140 = vpop.f32.mrf.mxu0
    %v141 = vadd.f32 0.0, %v140
    %142 = vdwg.mxu0
    %vm143 = vcmask 130048
    %v145 = vsel %vm143, %v112, 0
    %147 = vmatpush.msra.mxu0 0.0
    %148 = vmatpush.msra.mxu0 0.0
    %149 = vmatpush.msra.mxu0 0.0
    %150 = vmatpush.msra.mxu0 0.0
    %151 = vmatpush.msra.mxu0 0.0
    %152 = vmatpush.msra.mxu0 0.0
    %153 = vmatpush.msra.mxu0 0.0
    %154 = vmatpush.msra.mxu0 0.0
    %155 = vmatpush.msra.mxu0 0.0
    %156 = vmatpush.msra.mxu0 0.0
    %157 = vmatpush.msra.mxu0 0.0
    %158 = vmatpush.msra.mxu0 0.0
    %159 = vmatpush.msra.mxu0 0.0
    %160 = vmatpush.msra.mxu0 0.0
    %161 = vmatpush.msra.mxu0 %v114
    %162 = vmatpush.msra.mxu0 %v113
    %163 = vmatmul.f32.gmra.mxu0 %v145
    %v164 = vpop.f32.mrf.mxu0
    %v165 = vadd.f32 %v141, %v164
    %166 = vdwg.mxu0
    %v167 = vld [vmem:[#allocation7] sm:$0xff]
    %v168 = vld [vmem:[#allocation8 + $0x28] sm:$0xff]
    %v169 = vld [vmem:[#allocation8 + $0x30] sm:$0xff]
    %v170 = vld [vmem:[#allocation8 + $0x38] sm:$0xff]
    %v171 = vld [vmem:[#allocation8 + $0x40] sm:$0xff]
    %vm172 = vcmask 261120
    %v174 = vsel %vm172, %v167, 0
    %176 = vmatpush.msra.mxu0 0.0
    %177 = vmatpush.msra.mxu0 0.0
    %178 = vmatpush.msra.mxu0 0.0
    %179 = vmatpush.msra.mxu0 0.0
    %180 = vmatpush.msra.mxu0 0.0
    %181 = vmatpush.msra.mxu0 0.0
    %182 = vmatpush.msra.mxu0 0.0
    %183 = vmatpush.msra.mxu0 0.0
    %184 = vmatpush.msra.mxu0 0.0
    %185 = vmatpush.msra.mxu0 0.0
    %186 = vmatpush.msra.mxu0 0.0
    %187 = vmatpush.msra.mxu0 0.0
    %188 = vmatpush.msra.mxu0 %v171
    %189 = vmatpush.msra.mxu0 %v170
    %190 = vmatpush.msra.mxu0 %v169
    %191 = vmatpush.msra.mxu0 %v168
    %192 = vmatmul.f32.gmra.mxu0 %v174
    %v193 = vpop.f32.mrf.mxu0
    %v194 = vadd.f32 0.0, %v193
    %195 = vdwg.mxu0
    %v196 = vadd.f32 %v165, %v194
    %v197 = vld [vmem:[#allocation11] sm:$0x1]
    %v198 = vperm.slane %v197, 0
    %v199 = vadd.f32 %v196, %v198
    %v200 = vld [vmem:[#allocation10] sm:$0xff]
    %v201 = vld [vmem:[#allocation10 + $0x8] sm:$0xff]
    %v202 = vld [vmem:[#allocation10 + $0x10] sm:$0xff]
    %v203 = vld [vmem:[#allocation10 + $0x18] sm:$0xff]
    %v204 = vld [vmem:[#allocation10 + $0x20] sm:$0xff]
    %v205 = vld [vmem:[#allocation10 + $0x28] sm:$0xff]
    %v206 = vld [vmem:[#allocation10 + $0x30] sm:$0xff]
    %v207 = vld [vmem:[#allocation10 + $0x38] sm:$0xff]
    %v208 = vld [vmem:[#allocation10 + $0x40] sm:$0xff]
    %v209 = vld [vmem:[#allocation10 + $0x48] sm:$0xff]
    %v210 = vld [vmem:[#allocation10 + $0x50] sm:$0xff]
    %v211 = vld [vmem:[#allocation10 + $0x58] sm:$0xff]
    %v212 = vld [vmem:[#allocation10 + $0x60] sm:$0xff]
    %v213 = vld [vmem:[#allocation10 + $0x68] sm:$0xff]
    %v214 = vld [vmem:[#allocation10 + $0x70] sm:$0xff]
    %v215 = vld [vmem:[#allocation10 + $0x78] sm:$0xff]
    %v216 = vld [vmem:[#allocation10 + $0x80] sm:$0xff]
    %v217 = vld [vmem:[#allocation10 + $0x88] sm:$0xff]
    %v218 = vld [vmem:[#allocation10 + $0x90] sm:$0xff]
    %v219 = vld [vmem:[#allocation10 + $0x98] sm:$0xff]
    %v220 = vld [vmem:[#allocation10 + $0xa0] sm:$0xff]
    %v221 = vld [vmem:[#allocation10 + $0xa8] sm:$0xff]
    %v222 = vld [vmem:[#allocation10 + $0xb0] sm:$0xff]
    %v223 = vld [vmem:[#allocation10 + $0xb8] sm:$0xff]
    %s224 = scalar_lea.vmem [#allocation11], 1
    %v225 = vld [vmem:[%s224] ss:$4 sm:$0x3]
    %v227 = vperm.slane %v225, 0
    %v228 = vperm.slane %v225, 1
    %vm231 = vcmask 785408
    %v233 = vsel %vm231, %v199, 0
    %235 = vmatpush.msra.mxu0 0.0
    %236 = vmatpush.msra.mxu0 0.0
    %237 = vmatpush.msra.mxu0 0.0
    %238 = vmatpush.msra.mxu0 0.0
    %239 = vmatpush.msra.mxu0 %v222
    %240 = vmatpush.msra.mxu0 %v220
    %241 = vmatpush.msra.mxu0 %v218
    %242 = vmatpush.msra.mxu0 %v216
    %243 = vmatpush.msra.mxu0 %v214
    %244 = vmatpush.msra.mxu0 %v212
    %245 = vmatpush.msra.mxu0 %v210
    %246 = vmatpush.msra.mxu0 %v208
    %247 = vmatpush.msra.mxu0 %v206
    %248 = vmatpush.msra.mxu0 %v204
    %249 = vmatpush.msra.mxu0 %v202
    %250 = vmatpush.msra.mxu0 %v200
    %251 = vmatmul.f32.gmra.mxu0 %v233
    %v252 = vpop.f32.mrf.mxu0
    %v253 = vadd.f32 %v227, %v252
    %254 = vdwg.mxu0
    %255 = vmatpush.msra.mxu0 0.0
    %256 = vmatpush.msra.mxu0 0.0
    %257 = vmatpush.msra.mxu0 0.0
    %258 = vmatpush.msra.mxu0 0.0
    %259 = vmatpush.msra.mxu0 %v223
    %260 = vmatpush.msra.mxu0 %v221
    %261 = vmatpush.msra.mxu0 %v219
    %262 = vmatpush.msra.mxu0 %v217
    %263 = vmatpush.msra.mxu0 %v215
    %264 = vmatpush.msra.mxu0 %v213
    %265 = vmatpush.msra.mxu0 %v211
    %266 = vmatpush.msra.mxu0 %v209
    %267 = vmatpush.msra.mxu0 %v207
    %268 = vmatpush.msra.mxu0 %v205
    %269 = vmatpush.msra.mxu0 %v203
    %270 = vmatpush.msra.mxu0 %v201
    %271 = vmatmul.f32.gmra.mxu0 %v233
    %v272 = vpop.f32.mrf.mxu0
    %v273 = vadd.f32 %v228, %v272
    %274 = vdwg.mxu0
    %v275 = vmax.f32 %v253, 0.0
    %v276 = vmax.f32 %v273, 0.0
    %s277 = scalar_lea.vmem [#allocation11], 2
    %v278 = vld [vmem:[%s277] ss:$4 sm:$0x3]
    %v280 = vperm.slane %v278, 0
    %v281 = vperm.slane %v278, 1
    %v284 = vmul.f32 %v275, %v280
    %v285 = vmul.f32 %v276, %v281
    %vm286 = vcmask 523264
    %v287 = vsel %vm286, %v284, 0.0
    %288 = vadd.xlane.f32.xlu0 %v287
    %v289 = vpop.xlane.xlu0 %288
    %291 = vrot.lane.b32.xlu0 %v284, 64
    %v292 = vpop.permute.xlu0 %291
    %v294 = vsel %vm286, %v292, 0.0
    %295 = vadd.xlane.f32.xlu0 %v294
    %v296 = vpop.xlane.xlu0 %295
    %v297 = vsel %vm286, %v285, 0.0
    %298 = vadd.xlane.f32.xlu0 %v297
    %v299 = vpop.xlane.xlu0 %298
    %v300 = vmax.f32 %v289, %v296
    %v301 = vmax.f32 %v300, %v299
    %v302 = vsub.f32 %v289, %v301
    %v303 = vmul.f32 %v302, 1.442695
    %v304 = vpow.pop %v303
    %v305 = vsub.f32 %v296, %v301
    %v306 = vmul.f32 %v305, 1.442695
    %v307 = vpow.pop %v306
    %v308 = vsub.f32 %v299, %v301
    %v309 = vmul.f32 %v308, 1.442695
    %v310 = vpow.pop %v309
    %v311 = vadd.f32 %v304, %v307
    %v312 = vadd.f32 %v311, %v310
    %v313 = vrcp.pop %v312
    %v314 = vmul.f32 %v312, %v313
    %v315 = vsub.f32 1.0, %v314
    %v316 = vmul.f32 %v313, %v315
    %v317 = vadd.f32 %v313, %v316
    %vm318 = vweird.f32 %v312
    %vm319 = vweird.f32 %v313
    %vm320 = vmor %vm318, %vm319
    %v321 = vsel %vm320, %v313, %v317
    %v322 = vand.u32 2147483647, %v312
    %vm323 = vcmp.eq.f32.partialorder %v322, 8.507059e+37
    %v324 = vand.u32 %v312, 2147483648
    %v325 = vor.u32 1.1754944e-38, %v324
    %v326 = vsel %vm323, %v325, %v321
    %v327 = vmul.f32 %v304, %v326
    %v328 = vmul.f32 %v307, %v326
    %v329 = vmul.f32 %v310, %v326
    %v330 = vmul.f32 %v327, %v199
    %v331 = vmul.f32 %v328, %v199
    %333 = vrot.lane.b32.xlu0 %v331, 96
    %v334 = vpop.permute.xlu0 %333
    %v336 = vadd.f32 %v330, %v334
    %v337 = vmul.f32 %v329, %v199
    %339 = vrot.lane.b32.xlu0 %v337, 64
    %v340 = vpop.permute.xlu0 %339
    %v342 = vadd.f32 %v336, %v340
    %343 = vst.msk [vmem:[#allocation13] sm:$0xff] %vm172, %v342
    %v344 = vlaneseq
    %v345 = vand.u32 %v344, 127
    %vm346 = vcmp.eq.s32.totalorder %v345, 0
    %v347 = vsel %vm346, %v327, 0.0
    %vm348 = vcmp.eq.s32.totalorder %v345, 1
    %v349 = vsel %vm348, %v328, %v347
    %vm350 = vcmp.eq.s32.totalorder %v345, 2
    %v351 = vsel %vm350, %v329, %v349
    %vm352 = vcmask 23552
    %353 = vst.msk [vmem:[%s7] sm:$0xff] %vm352, %v351
    // Predicated region
    $region50: #{tpu_custom_call.1} parent=1 // pred_check
      _
    $region51: #{tpu_custom_call.1} parent=1 // pred_check_branch
      %355 = sbr.rel (0) target = $region53
    $region52: #{tpu_custom_call.1} parent=1 // pred_region
      %357 = vsyncadd [#allocation4], 0
      %s359 = sshll.u32 [#allocation13], 4
      %s360 = int_to_ptr.vmem [resolvable:$true] %s359
      %s361 = sshll.u32 %s6, 4
      %s362 = int_to_ptr.hbm [resolvable:$true] %s361
      %364 = dma.vmem_to_hbm [thread:$0]  %s360, 128, %s362, [#allocation4]
    $region53: #{tpu_custom_call.1} parent=1 // pred_fallthru
      _
    // Predicated region
    $region54: #{tpu_custom_call.1} parent=1 // pred_check
      _
    $region55: #{tpu_custom_call.1} parent=1 // pred_check_branch
      %366 = sbr.rel (0) target = $region57
    $region56: #{tpu_custom_call.1} parent=1 // pred_region
      _
    $region57: #{tpu_custom_call.1} parent=1 // pred_fallthru
      _
    // Predicated region
    $region58: #{tpu_custom_call.1} parent=1 // pred_check
      _
    $region59: #{tpu_custom_call.1} parent=1 // pred_check_branch
      %368 = sbr.rel (0) target = $region61
    $region60: #{tpu_custom_call.1} parent=1 // pred_region
      %370 = dma.done [#allocation4], 128
    $region61: #{tpu_custom_call.1} parent=1 // pred_fallthru
      _
    // Predicated region
    $region62: #{tpu_custom_call.1} parent=1 // pred_check
      _
    $region63: #{tpu_custom_call.1} parent=1 // pred_check_branch
      %372 = sbr.rel (0) target = $region65
    $region64: #{tpu_custom_call.1} parent=1 // pred_region
      _
    $region65: #{tpu_custom_call.1} parent=1 // pred_fallthru
      _
    %373 = vsyncpa [#allocation3], 1
    %374 = vsyncpa [#allocation6], 1
    %375 = vsyncpa [#allocation9], 1
    %376 = vsyncpa [#allocation12], 1
    %377 = vsyncpa [#allocation4], 1

</llo_original>
